<compile_context>
chip_gen: v6e
topology: v6e:2x2x1
jax: 0.10.0
libtpu: 0.0.40
codegen_flags: <defaults>
</compile_context>

<pallas_src>
from functools import partial

import jax
import jax.numpy as jnp
from jax.experimental import pallas as pl
from jax.experimental.pallas import tpu as pltpu


NC_PAD = 128  # lane-dense padded head width


# ----------------------------------------------------------------------------
# Fused Pallas kernel (single invocation, whole batch):
#   conv_before -> bilinear downsample (separable) -> conv_after
#   -> global average pool -> linear head
# ----------------------------------------------------------------------------
def _fused_surrogate_kernel(x_ref, wb_ref, wyb_ref, wx_ref, wa_ref, p_ref,
                            whd_ref, bh_ref, o_ref):
    bf16 = jnp.bfloat16
    x = x_ref[...]                                                       # [B*H, W*Cin] bf16

    # conv_before (1x1 conv) in the channel-interleaved layout:
    # block-diag weights Wb_blk = I_W (x) wb.
    y = jnp.dot(x, wb_ref[...], preferred_element_type=jnp.float32)     # [B*H, W*Cmid]

    # Separable bilinear downsample, H axis: batch-blocked left matmul by
    # kron(I_B, Wy)  [B*h, B*H].
    t = jnp.dot(wyb_ref[...], y.astype(bf16),
                preferred_element_type=jnp.float32)                     # [B*h, W*Cmid]

    # Separable bilinear downsample, W axis: right matmul by Wx^T (x) I_Cmid.
    z = jnp.dot(t.astype(bf16), wx_ref[...],
                preferred_element_type=jnp.float32)                     # [B*h, w*Cmid]

    # conv_after (1x1 conv): block-diag weights Wa_blk = I_w (x) wa
    # (bias folded into the head bias on the host).
    u = jnp.dot(z.astype(bf16), wa_ref[...],
                preferred_element_type=jnp.float32)                     # [B*h, w*Cout]

    # Global average pool: per-batch sum over the h rows (P = I_B (x) 1_h);
    # the w-group sum and the 1/(h*w) scale are folded into whd on the host.
    s = jnp.dot(p_ref[...], u.astype(bf16),
                preferred_element_type=jnp.float32)                     # [B, w*Cout]

    # Linear head, padded to a lane-dense 128-wide output.
    logits = jnp.dot(s.astype(bf16), whd_ref[...],
                     preferred_element_type=jnp.float32) + bh_ref[...]  # [B, 128]
    o_ref[...] = logits.astype(o_ref.dtype)


# ----------------------------------------------------------------------------
# Host-side operator preparation (done once, plain JAX, f32 then cast to bf16)
# ----------------------------------------------------------------------------
def _bilinear_1d_matrix(in_size, out_size):
    """1-D interpolation matrix matching F.interpolate(mode='bilinear',
    align_corners=False) along one spatial axis.  Shape [out_size, in_size]."""
    scale = in_size / out_size
    d = jnp.arange(out_size, dtype=jnp.float32)
    src = jnp.maximum(scale * (d + 0.5) - 0.5, 0.0)
    i0 = jnp.minimum(jnp.floor(src).astype(jnp.int32), in_size - 1)
    i1 = jnp.minimum(i0 + 1, in_size - 1)
    w1 = src - i0.astype(jnp.float32)
    w0 = 1.0 - w1
    rows = jnp.arange(out_size)
    M = jnp.zeros((out_size, in_size), jnp.float32)
    M = M.at[rows, i0].add(w0)
    M = M.at[rows, i1].add(w1)
    return M


def prepare_fused_operators(params, B, H, W, h, w, num_classes):
    """Build the block-diagonal / separable operators consumed by the kernel."""
    Cin, Cmid = params["wb"].shape
    Cout = params["wa"].shape[1]

    def eye(n):
        return jnp.eye(n, dtype=jnp.float32)

    wy = _bilinear_1d_matrix(H, h)                                     # [h, H]
    wx = _bilinear_1d_matrix(W, w)                                     # [w, W]

    wb_blk = jnp.kron(eye(W), params["wb"])                            # [W*Cin, W*Cmid]
    bb_t = jnp.tile(params["bb"], W)[None, :]                          # [1, W*Cmid]
    wyb = jnp.kron(eye(B), wy)                                         # [B*h, B*H]
    wx_blk = jnp.kron(wx.T, eye(Cmid))                                 # [W*Cmid, w*Cmid]
    wa_blk = jnp.kron(eye(w), params["wa"])                            # [w*Cmid, w*Cout]
    ba_t = jnp.tile(params["ba"], w)[None, :]                          # [1, w*Cout]

    # Fold (sum over the w groups inside the minor dim) + 1/(h*w) scale into
    # the head weight.
    pool = jnp.kron(jnp.ones((w, 1), jnp.float32), eye(Cout)) / float(h * w)  # [w*Cout, Cout]
    whd = pool @ params["wh"]                                          # [w*Cout, NC]

    # Exact fold of both conv biases into the head bias: every downstream op is
    # linear and the bilinear rows of Wy sum to 1, so the bias contribution is a
    # per-row constant: bh_eff = bh + h * (bb_t @ Wx_blk @ Wa_blk + ba_t) @ whd.
    bh_eff = params["bh"][None, :] + float(h) * (
        (bb_t @ wx_blk @ wa_blk + ba_t) @ whd)                         # [1, NC]

    # Per-batch segmented sum over the h rows (pool along H after flattening B).
    pmat = jnp.kron(eye(B), jnp.ones((1, h), jnp.float32))             # [B, B*h]

    # Pad the head to a lane-dense (128) output width.
    whd_pad = jnp.zeros((w * Cout, NC_PAD), jnp.float32).at[:, :num_classes].set(whd)
    bh_pad = jnp.zeros((1, NC_PAD), jnp.float32).at[:, :num_classes].set(bh_eff)

    # Weights in bf16 (halves DMA bytes, native MXU path); bias stays f32 since
    # it is added after the f32 accumulation.
    return {
        "wb_blk": wb_blk.astype(jnp.bfloat16),
        "wyb": wyb.astype(jnp.bfloat16),
        "wx_blk": wx_blk.astype(jnp.bfloat16),
        "wa_blk": wa_blk.astype(jnp.bfloat16),
        "pmat": pmat.astype(jnp.bfloat16),
        "whd_pad": whd_pad.astype(jnp.bfloat16),
        "bh_pad": bh_pad,
    }


# ----------------------------------------------------------------------------
# Forward pass
# ----------------------------------------------------------------------------
@partial(jax.jit, static_argnames="num_classes")
def eval_surrogate_forward(x_nchw, ops, *, num_classes):
    """EvalSurrogateModel forward: one fused Pallas kernel, whole batch at once."""
    B, Cin, H, W = x_nchw.shape

    # NCHW -> NHWC -> channel-interleaved [B*H, W*Cin], bf16.
    # allow_input_fusion on operand 0 lets XLA fuse this relayout into the
    # pallas_call instead of a separate HBM round trip.
    x_h = (jnp.transpose(x_nchw, (0, 2, 3, 1))
           .reshape(B * H, W * Cin)
           .astype(jnp.bfloat16))

    vmem = pl.BlockSpec(memory_space=pltpu.MemorySpace.VMEM)
    out_pad = pl.pallas_call(
        _fused_surrogate_kernel,
        out_shape=jax.ShapeDtypeStruct((B, NC_PAD), jnp.float32),
        in_specs=[vmem] * 8,
        out_specs=vmem,
        compiler_params=pltpu.CompilerParams(
            allow_input_fusion=[True] + [False] * 7),
    )(x_h, ops["wb_blk"], ops["wyb"], ops["wx_blk"], ops["wa_blk"],
      ops["pmat"], ops["whd_pad"], ops["bh_pad"])

    return out_pad[:, :num_classes]


# ----------------------------------------------------------------------------
# Pure-jnp reference with literal PyTorch semantics (for verification)
# ----------------------------------------------------------------------------
def reference_forward(x_nchw, params, h, w):
    x = jnp.transpose(x_nchw, (0, 2, 3, 1)).astype(jnp.float32)        # NHWC
    B, H, W, Cin = x.shape
    y = x @ params["wb"] + params["bb"]                                # conv_before (1x1)
    wy = _bilinear_1d_matrix(H, h)
    wx = _bilinear_1d_matrix(W, w)
    t = jnp.einsum("ip,bpqc->biqc", wy, y)                             # H downsample
    z = jnp.einsum("jq,biqc->bijc", wx, t)                             # W downsample
    u = z @ params["wa"] + params["ba"]                                # conv_after (1x1)
    pooled = u.mean(axis=(1, 2))                                       # global avg pool
    return pooled @ params["wh"] + params["bh"]                        # linear head


def init_params(key, cin, cmid, cout, num_classes):
    ks = jax.random.split(key, 6)
    s = 0.1
    return {
        "wb": s * jax.random.normal(ks[0], (cin, cmid), jnp.float32),   # conv_before (1x1)
        "bb": s * jax.random.normal(ks[1], (cmid,), jnp.float32),
        "wa": s * jax.random.normal(ks[2], (cmid, cout), jnp.float32),  # conv_after (1x1)
        "ba": s * jax.random.normal(ks[3], (cout,), jnp.float32),
        "wh": s * jax.random.normal(ks[4], (cout, num_classes), jnp.float32),
        "bh": s * jax.random.normal(ks[5], (num_classes,), jnp.float32),
    }


# ----------------------------------------------------------------------------
if __name__ == "__main__":
    B, Cin, H, W = 2, 4, 16, 16
    Cmid, Cout = 8, 8
    h, w = 8, 8            # hook-point downsampled spatial size
    num_classes = 10

    key = jax.random.PRNGKey(0)
    kx, kp = jax.random.split(key)
    x = jax.random.normal(kx, (B, Cin, H, W), jnp.float32)   # NCHW input
    params = init_params(kp, Cin, Cmid, Cout, num_classes)
    ops = prepare_fused_operators(params, B, H, W, h, w, num_classes)

    out = eval_surrogate_forward(x, ops, num_classes=num_classes)
    out = jax.block_until_ready(out)

    ref = reference_forward(x, params, h, w)
    assert out.shape == (B, num_classes)
    # bf16 operands (f32 accumulation) -> loosened tolerance vs the f32 reference.
    assert jnp.allclose(out, ref, rtol=2e-2, atol=2e-2), (
        f"mismatch: max abs err {jnp.max(jnp.abs(out - ref))}")

    print("KERNEL_OK")
</pallas_src>

<mosaic_0001>
module attributes {stable_mosaic.version = 11 : i64} {
  func.func @_fused_surrogate_kernel(%arg0: memref<32x64xbf16, #tpu.memory_space<vmem>>, %arg1: memref<64x128xbf16, #tpu.memory_space<vmem>>, %arg2: memref<16x32xbf16, #tpu.memory_space<vmem>>, %arg3: memref<128x64xbf16, #tpu.memory_space<vmem>>, %arg4: memref<64x64xbf16, #tpu.memory_space<vmem>>, %arg5: memref<2x16xbf16, #tpu.memory_space<vmem>>, %arg6: memref<64x128xbf16, #tpu.memory_space<vmem>>, %arg7: memref<1x128xf32, #tpu.memory_space<vmem>>, %arg8: memref<2x128xf32, #tpu.memory_space<vmem>>) attributes {dimension_semantics = [], scalar_prefetch = 0 : i64, scratch_operands = 0 : i64, tpu.core_type = #tpu.core_type<tc>} {
    %c0 = arith.constant 0 : index
    %c0_0 = arith.constant 0 : index
    %0 = vector.load %arg0[%c0, %c0_0] : memref<32x64xbf16, #tpu.memory_space<vmem>>, vector<32x64xbf16>
    %c0_1 = arith.constant 0 : index
    %c0_2 = arith.constant 0 : index
    %1 = vector.load %arg1[%c0_1, %c0_2] : memref<64x128xbf16, #tpu.memory_space<vmem>>, vector<64x128xbf16>
    %cst = arith.constant dense<0.000000e+00> : vector<32x128xf32>
    %2 = tpu.matmul %0, %1, %cst {dimension_numbers = #tpu.dot_dimension_numbers<[1], [0], [0], [1], [0, 0, 1, 1], [], []>} : vector<32x64xbf16>, vector<64x128xbf16>, vector<32x128xf32> -> vector<32x128xf32>
    %c0_3 = arith.constant 0 : index
    %c0_4 = arith.constant 0 : index
    %3 = vector.load %arg2[%c0_3, %c0_4] : memref<16x32xbf16, #tpu.memory_space<vmem>>, vector<16x32xbf16>
    %4 = arith.truncf %2 : vector<32x128xf32> to vector<32x128xbf16>
    %cst_5 = arith.constant dense<0.000000e+00> : vector<16x128xf32>
    %5 = tpu.matmul %3, %4, %cst_5 {dimension_numbers = #tpu.dot_dimension_numbers<[1], [0], [0], [1], [0, 0, 1, 1], [], []>} : vector<16x32xbf16>, vector<32x128xbf16>, vector<16x128xf32> -> vector<16x128xf32>
    %6 = arith.truncf %5 : vector<16x128xf32> to vector<16x128xbf16>
    %c0_6 = arith.constant 0 : index
    %c0_7 = arith.constant 0 : index
    %7 = vector.load %arg3[%c0_6, %c0_7] : memref<128x64xbf16, #tpu.memory_space<vmem>>, vector<128x64xbf16>
    %cst_8 = arith.constant dense<0.000000e+00> : vector<16x64xf32>
    %8 = tpu.matmul %6, %7, %cst_8 {dimension_numbers = #tpu.dot_dimension_numbers<[1], [0], [0], [1], [0, 0, 1, 1], [], []>} : vector<16x128xbf16>, vector<128x64xbf16>, vector<16x64xf32> -> vector<16x64xf32>
    %9 = arith.truncf %8 : vector<16x64xf32> to vector<16x64xbf16>
    %c0_9 = arith.constant 0 : index
    %c0_10 = arith.constant 0 : index
    %10 = vector.load %arg4[%c0_9, %c0_10] : memref<64x64xbf16, #tpu.memory_space<vmem>>, vector<64x64xbf16>
    %cst_11 = arith.constant dense<0.000000e+00> : vector<16x64xf32>
    %11 = tpu.matmul %9, %10, %cst_11 {dimension_numbers = #tpu.dot_dimension_numbers<[1], [0], [0], [1], [0, 0, 1, 1], [], []>} : vector<16x64xbf16>, vector<64x64xbf16>, vector<16x64xf32> -> vector<16x64xf32>
    %c0_12 = arith.constant 0 : index
    %c0_13 = arith.constant 0 : index
    %12 = vector.load %arg5[%c0_12, %c0_13] : memref<2x16xbf16, #tpu.memory_space<vmem>>, vector<2x16xbf16>
    %13 = arith.truncf %11 : vector<16x64xf32> to vector<16x64xbf16>
    %cst_14 = arith.constant dense<0.000000e+00> : vector<2x64xf32>
    %14 = tpu.matmul %12, %13, %cst_14 {dimension_numbers = #tpu.dot_dimension_numbers<[1], [0], [0], [1], [0, 0, 1, 1], [], []>} : vector<2x16xbf16>, vector<16x64xbf16>, vector<2x64xf32> -> vector<2x64xf32>
    %15 = arith.truncf %14 : vector<2x64xf32> to vector<2x64xbf16>
    %c0_15 = arith.constant 0 : index
    %c0_16 = arith.constant 0 : index
    %16 = vector.load %arg6[%c0_15, %c0_16] : memref<64x128xbf16, #tpu.memory_space<vmem>>, vector<64x128xbf16>
    %cst_17 = arith.constant dense<0.000000e+00> : vector<2x128xf32>
    %17 = tpu.matmul %15, %16, %cst_17 {dimension_numbers = #tpu.dot_dimension_numbers<[1], [0], [0], [1], [0, 0, 1, 1], [], []>} : vector<2x64xbf16>, vector<64x128xbf16>, vector<2x128xf32> -> vector<2x128xf32>
    %c0_18 = arith.constant 0 : index
    %c0_19 = arith.constant 0 : index
    %18 = vector.load %arg7[%c0_18, %c0_19] : memref<1x128xf32, #tpu.memory_space<vmem>>, vector<1x128xf32>
    %19 = vector.broadcast %18 : vector<1x128xf32> to vector<2x128xf32>
    %20 = arith.addf %17, %19 : vector<2x128xf32>
    %c0_20 = arith.constant 0 : index
    %c0_21 = arith.constant 0 : index
    %21 = vector.load %arg8[%c0_20, %c0_21] : memref<2x128xf32, #tpu.memory_space<vmem>>, vector<2x128xf32>
    tpu.vector_store %arg8[%c0_20, %c0_21], %20 {strides = array<i32>} : memref<2x128xf32, #tpu.memory_space<vmem>>, vector<2x128xf32>,
    return
  }
}

</mosaic_0001>

<llo_original>
// kernel: eval_surrogate_forward.1
$region0: #{eval_surrogate_forward.1}
  #allocation0 [shape = 'u32[]', space=smem, size = 0x4, offset = 0x4, fixed_abs, tag = 'smem constant byte address 0x4 - core index']
  #allocation1 [shape = 'u32[144,128]{1,0:T(1,128)}', space=vmem, size = 0x12000, scoped, tag = 'internal scratch']
  %s0 = inlined_call_operand.vmem [shape: bf16[32,64], index: 0, kind: input, shape index: {}]
  %s1 = inlined_call_operand.vmem [shape: bf16[64,128], index: 1, kind: input, shape index: {}]
  %s2 = inlined_call_operand.vmem [shape: bf16[16,32], index: 2, kind: input, shape index: {}]
  %s3 = inlined_call_operand.vmem [shape: bf16[128,64], index: 3, kind: input, shape index: {}]
  %s4 = inlined_call_operand.vmem [shape: bf16[64,64], index: 4, kind: input, shape index: {}]
  %s5 = inlined_call_operand.vmem [shape: bf16[2,16], index: 5, kind: input, shape index: {}]
  %s6 = inlined_call_operand.vmem [shape: bf16[64,128], index: 6, kind: input, shape index: {}]
  %s7 = inlined_call_operand.vmem [shape: f32[1,128], index: 7, kind: input, shape index: {}]
  %s8 = inlined_call_operand.hbm [shape: f32[2,128], index: 8, kind: output, shape index: {}]
  %s9 = sld [smem:[#allocation0]]
  $region42: #{eval_surrogate_forward.1} parent=0
    _
  %s11 = ssub.s32 1, %s9
  %s12 = scalar_select 0, %s11, %s9
  $region1: #{eval_surrogate_forward.1} parent=0
    #allocation2 [shape = 'u8[1024]{0}', space=vmem, size = 0x400, scoped, tag = 'output window, operand 0, single buffered']
    #allocation3 [shape = 's32[1]{0}', space=sflag, size = 0x4, scoped, tag = 'scoped memory for eval_surrogate_forward.1']
    %13 = vsyncpa [#allocation3], 0
    // Predicated region
    $region2: #{eval_surrogate_forward.1} parent=1 // pred_check
      _
    $region3: #{eval_surrogate_forward.1} parent=1 // pred_check_branch
      %15 = sbr.rel (0) target = $region5
    $region4: #{eval_surrogate_forward.1} parent=1 // pred_region
      _
    $region5: #{eval_surrogate_forward.1} parent=1 // pred_fallthru
      _
    // Predicated region
    $region6: #{eval_surrogate_forward.1} parent=1 // pred_check
      _
    $region7: #{eval_surrogate_forward.1} parent=1 // pred_check_branch
      %17 = sbr.rel (0) target = $region9
    $region8: #{eval_surrogate_forward.1} parent=1 // pred_region
      _
    $region9: #{eval_surrogate_forward.1} parent=1 // pred_fallthru
      _
    // Predicated region
    $region10: #{eval_surrogate_forward.1} parent=1 // pred_check
      _
    $region11: #{eval_surrogate_forward.1} parent=1 // pred_check_branch
      %19 = sbr.rel (0) target = $region13
    $region12: #{eval_surrogate_forward.1} parent=1 // pred_region
      _
    $region13: #{eval_surrogate_forward.1} parent=1 // pred_fallthru
      _
    // Predicated region
    $region14: #{eval_surrogate_forward.1} parent=1 // pred_check
      _
    $region15: #{eval_surrogate_forward.1} parent=1 // pred_check_branch
      %21 = sbr.rel (0) target = $region17
    $region16: #{eval_surrogate_forward.1} parent=1 // pred_region
      _
    $region17: #{eval_surrogate_forward.1} parent=1 // pred_fallthru
      _
    // Predicated region
    $region18: #{eval_surrogate_forward.1} parent=1 // pred_check
      _
    $region19: #{eval_surrogate_forward.1} parent=1 // pred_check_branch
      %23 = sbr.rel (0) target = $region21
    $region20: #{eval_surrogate_forward.1} parent=1 // pred_region
      _
    $region21: #{eval_surrogate_forward.1} parent=1 // pred_fallthru
      _
    // Predicated region
    $region22: #{eval_surrogate_forward.1} parent=1 // pred_check
      _
    $region23: #{eval_surrogate_forward.1} parent=1 // pred_check_branch
      %25 = sbr.rel (0) target = $region25
    $region24: #{eval_surrogate_forward.1} parent=1 // pred_region
      _
    $region25: #{eval_surrogate_forward.1} parent=1 // pred_fallthru
      _
    // Predicated region
    $region26: #{eval_surrogate_forward.1} parent=1 // pred_check
      _
    $region27: #{eval_surrogate_forward.1} parent=1 // pred_check_branch
      %27 = sbr.rel (0) target = $region29
    $region28: #{eval_surrogate_forward.1} parent=1 // pred_region
      _
    $region29: #{eval_surrogate_forward.1} parent=1 // pred_fallthru
      _
    // Predicated region
    $region30: #{eval_surrogate_forward.1} parent=1 // pred_check
      _
    $region31: #{eval_surrogate_forward.1} parent=1 // pred_check_branch
      %29 = sbr.rel (0) target = $region33
    $region32: #{eval_surrogate_forward.1} parent=1 // pred_region
      _
    $region33: #{eval_surrogate_forward.1} parent=1 // pred_fallthru
      _
    %v31 = vld [vmem:[%s0] sm:$0xf]
    %v32 = vld [vmem:[%s0 + $0x4] sm:$0xf]
    %v33 = vld [vmem:[%s0 + $0x8] sm:$0xf]
    %v34 = vld [vmem:[%s0 + $0xc] sm:$0xf]
    %v35 = vld [vmem:[%s1] sm:$0xf]
    %v36 = vld [vmem:[%s1 + $0x4] sm:$0xf]
    %v37 = vld [vmem:[%s1 + $0x8] sm:$0xf]
    %v38 = vld [vmem:[%s1 + $0xc] sm:$0xf]
    %v39 = vld [vmem:[%s1 + $0x10] sm:$0xf]
    %v40 = vld [vmem:[%s1 + $0x14] sm:$0xf]
    %v41 = vld [vmem:[%s1 + $0x18] sm:$0xf]
    %v42 = vld [vmem:[%s1 + $0x1c] sm:$0xf]
    %v47 = vunpack.c.l.b16 %v31
    %v48 = vunpack.c.l.b16 %v32
    %v49 = vunpack.c.l.b16 %v33
    %v50 = vunpack.c.l.b16 %v34
    %v51 = vpack.c.b16 %v48, %v47
    %v52 = vpack.c.b16 %v50, %v49
    %v61 = vunpack.c.l.b16 %v35
    %v62 = vunpack.c.l.b16 %v36
    %v63 = vunpack.c.l.b16 %v37
    %v64 = vunpack.c.l.b16 %v38
    %v65 = vunpack.c.l.b16 %v39
    %v66 = vunpack.c.l.b16 %v40
    %v67 = vunpack.c.l.b16 %v41
    %v68 = vunpack.c.l.b16 %v42
    %v69 = vpack.c.b16 %v62, %v61
    %v70 = vpack.c.b16 %v64, %v63
    %v71 = vpack.c.b16 %v66, %v65
    %v72 = vpack.c.b16 %v68, %v67
    %vm77 = vcmask 523264
    %v79 = vsel %vm77, %v51, 0
    %v82 = vsel %vm77, %v52, 0
    %84 = vmatprep.subr.bf16.mxu0 0
    %85 = vmatpush1.bf16.msra.mxu0 0
    %86 = vmatprep.subr.bf16.mxu0 0
    %87 = vmatpush1.bf16.msra.mxu0 0
    %88 = vmatprep.subr.bf16.mxu0 0
    %89 = vmatpush1.bf16.msra.mxu0 0
    %90 = vmatprep.subr.bf16.mxu0 0
    %91 = vmatpush1.bf16.msra.mxu0 0
    %92 = vmatprep.subr.bf16.mxu0 0
    %93 = vmatpush1.bf16.msra.mxu0 %v72
    %94 = vmatprep.subr.bf16.mxu0 0
    %95 = vmatpush1.bf16.msra.mxu0 %v71
    %96 = vmatprep.subr.bf16.mxu0 0
    %97 = vmatpush1.bf16.msra.mxu0 %v70
    %98 = vmatprep.subr.bf16.mxu0 0
    %99 = vmatpush1.bf16.msra.mxu0 %v69
    %100 = vmatprep.subr.bf16.mxu0 0
    %101 = vmatpush2.bf16.msra.mxu0 0
    %102 = vmatprep.subr.bf16.mxu0 0
    %103 = vmatpush2.bf16.msra.mxu0 0
    %104 = vmatprep.subr.bf16.mxu0 0
    %105 = vmatpush2.bf16.msra.mxu0 0
    %106 = vmatprep.subr.bf16.mxu0 0
    %107 = vmatpush2.bf16.msra.mxu0 0
    %108 = vmatprep.subr.bf16.mxu0 0
    %109 = vmatpush2.bf16.msra.mxu0 0
    %110 = vmatprep.subr.bf16.mxu0 0
    %111 = vmatpush2.bf16.msra.mxu0 0
    %112 = vmatprep.subr.bf16.mxu0 0
    %113 = vmatpush2.bf16.msra.mxu0 0
    %114 = vmatprep.subr.bf16.mxu0 0
    %115 = vmatpush2.bf16.msra.mxu0 0
    %116 = vmatprep.mubr.bf16.mxu0 0
    %117 = vmatmul.mubr.bf16.gmra.mxu0 %v79
    %v118 = vpop.f32.mrf.mxu0
    %v119 = vadd.f32 0.0, %v118
    %v120 = vpop.f32.mrf.mxu0
    %v121 = vpop.f32.mrf.mxu0
    %v122 = vadd.f32 0.0, %v121
    %v123 = vpop.f32.mrf.mxu0
    %124 = vmatprep.mubr.bf16.mxu0 0
    %125 = vmatmul.mubr.bf16.gmra.mxu0 %v82
    %v126 = vpop.f32.mrf.mxu0
    %v127 = vadd.f32 0.0, %v126
    %v128 = vpop.f32.mrf.mxu0
    %v129 = vpop.f32.mrf.mxu0
    %v130 = vadd.f32 0.0, %v129
    %v131 = vpop.f32.mrf.mxu0
    %132 = vdwg.mxu0
    %v133 = vld [vmem:[%s2] sm:$0xf]
    %v134 = vld [vmem:[%s2 + $0x4] sm:$0xf]
    %v135 = vpack.c.bf16 %v122, %v119
    %v136 = vpack.c.bf16 %v130, %v127
    %v139 = vunpack.c.l.b16 %v133
    %v140 = vunpack.c.l.b16 %v134
    %v141 = vpack.c.b16 %v140, %v139
    %vm142 = vcmask 261120
    %v144 = vsel %vm142, %v141, 0
    %146 = vmatprep.subr.bf16.mxu0 0
    %147 = vmatpush1.bf16.msra.mxu0 0
    %148 = vmatprep.subr.bf16.mxu0 0
    %149 = vmatpush1.bf16.msra.mxu0 0
    %150 = vmatprep.subr.bf16.mxu0 0
    %151 = vmatpush1.bf16.msra.mxu0 0
    %152 = vmatprep.subr.bf16.mxu0 0
    %153 = vmatpush1.bf16.msra.mxu0 0
    %154 = vmatprep.subr.bf16.mxu0 0
    %155 = vmatpush1.bf16.msra.mxu0 0
    %156 = vmatprep.subr.bf16.mxu0 0
    %157 = vmatpush1.bf16.msra.mxu0 0
    %158 = vmatprep.subr.bf16.mxu0 0
    %159 = vmatpush1.bf16.msra.mxu0 %v136
    %160 = vmatprep.subr.bf16.mxu0 0
    %161 = vmatpush1.bf16.msra.mxu0 %v135
    %162 = vmatprep.subr.bf16.mxu0 0
    %163 = vmatpush2.bf16.msra.mxu0 0
    %164 = vmatprep.subr.bf16.mxu0 0
    %165 = vmatpush2.bf16.msra.mxu0 0
    %166 = vmatprep.subr.bf16.mxu0 0
    %167 = vmatpush2.bf16.msra.mxu0 0
    %168 = vmatprep.subr.bf16.mxu0 0
    %169 = vmatpush2.bf16.msra.mxu0 0
    %170 = vmatprep.subr.bf16.mxu0 0
    %171 = vmatpush2.bf16.msra.mxu0 0
    %172 = vmatprep.subr.bf16.mxu0 0
    %173 = vmatpush2.bf16.msra.mxu0 0
    %174 = vmatprep.subr.bf16.mxu0 0
    %175 = vmatpush2.bf16.msra.mxu0 0
    %176 = vmatprep.subr.bf16.mxu0 0
    %177 = vmatpush2.bf16.msra.mxu0 0
    %178 = vmatprep.mubr.bf16.mxu0 0
    %179 = vmatmul.mubr.bf16.gmra.mxu0 %v144
    %v180 = vpop.f32.mrf.mxu0
    %v181 = vadd.f32 0.0, %v180
    %v182 = vpop.f32.mrf.mxu0
    %v183 = vpop.f32.mrf.mxu0
    %v184 = vadd.f32 0.0, %v183
    %v185 = vpop.f32.mrf.mxu0
    %186 = vdwg.mxu0
    %v187 = vpack.c.bf16 %v184, %v181
    %v188 = vld [vmem:[%s3] sm:$0xf]
    %v189 = vld [vmem:[%s3 + $0x4] sm:$0xf]
    %v190 = vld [vmem:[%s3 + $0x8] sm:$0xf]
    %v191 = vld [vmem:[%s3 + $0xc] sm:$0xf]
    %v192 = vld [vmem:[%s3 + $0x10] sm:$0xf]
    %v193 = vld [vmem:[%s3 + $0x14] sm:$0xf]
    %v194 = vld [vmem:[%s3 + $0x18] sm:$0xf]
    %v195 = vld [vmem:[%s3 + $0x1c] sm:$0xf]
    %v196 = vld [vmem:[%s3 + $0x20] sm:$0xf]
    %v197 = vld [vmem:[%s3 + $0x24] sm:$0xf]
    %v198 = vld [vmem:[%s3 + $0x28] sm:$0xf]
    %v199 = vld [vmem:[%s3 + $0x2c] sm:$0xf]
    %v200 = vld [vmem:[%s3 + $0x30] sm:$0xf]
    %v201 = vld [vmem:[%s3 + $0x34] sm:$0xf]
    %v202 = vld [vmem:[%s3 + $0x38] sm:$0xf]
    %v203 = vld [vmem:[%s3 + $0x3c] sm:$0xf]
    %v220 = vunpack.c.l.b16 %v188
    %v221 = vunpack.c.l.b16 %v189
    %v222 = vunpack.c.l.b16 %v190
    %v223 = vunpack.c.l.b16 %v191
    %v224 = vunpack.c.l.b16 %v192
    %v225 = vunpack.c.l.b16 %v193
    %v226 = vunpack.c.l.b16 %v194
    %v227 = vunpack.c.l.b16 %v195
    %v228 = vunpack.c.l.b16 %v196
    %v229 = vunpack.c.l.b16 %v197
    %v230 = vunpack.c.l.b16 %v198
    %v231 = vunpack.c.l.b16 %v199
    %v232 = vunpack.c.l.b16 %v200
    %v233 = vunpack.c.l.b16 %v201
    %v234 = vunpack.c.l.b16 %v202
    %v235 = vunpack.c.l.b16 %v203
    %v236 = vpack.c.b16 %v221, %v220
    %v237 = vpack.c.b16 %v223, %v222
    %v238 = vpack.c.b16 %v225, %v224
    %v239 = vpack.c.b16 %v227, %v226
    %v240 = vpack.c.b16 %v229, %v228
    %v241 = vpack.c.b16 %v231, %v230
    %v242 = vpack.c.b16 %v233, %v232
    %v243 = vpack.c.b16 %v235, %v234
    %252 = vmatprep.subr.bf16.mxu0 0
    %253 = vmatpush1.bf16.msra.mxu0 %v243
    %254 = vmatprep.subr.bf16.mxu0 0
    %255 = vmatpush1.bf16.msra.mxu0 %v242
    %256 = vmatprep.subr.bf16.mxu0 0
    %257 = vmatpush1.bf16.msra.mxu0 %v241
    %258 = vmatprep.subr.bf16.mxu0 0
    %259 = vmatpush1.bf16.msra.mxu0 %v240
    %260 = vmatprep.subr.bf16.mxu0 0
    %261 = vmatpush1.bf16.msra.mxu0 %v239
    %262 = vmatprep.subr.bf16.mxu0 0
    %263 = vmatpush1.bf16.msra.mxu0 %v238
    %264 = vmatprep.subr.bf16.mxu0 0
    %265 = vmatpush1.bf16.msra.mxu0 %v237
    %266 = vmatprep.subr.bf16.mxu0 0
    %267 = vmatpush1.bf16.msra.mxu0 %v236
    %268 = vmatprep.subr.bf16.mxu0 0
    %269 = vmatpush2.bf16.msra.mxu0 0
    %270 = vmatprep.subr.bf16.mxu0 0
    %271 = vmatpush2.bf16.msra.mxu0 0
    %272 = vmatprep.subr.bf16.mxu0 0
    %273 = vmatpush2.bf16.msra.mxu0 0
    %274 = vmatprep.subr.bf16.mxu0 0
    %275 = vmatpush2.bf16.msra.mxu0 0
    %276 = vmatprep.subr.bf16.mxu0 0
    %277 = vmatpush2.bf16.msra.mxu0 0
    %278 = vmatprep.subr.bf16.mxu0 0
    %279 = vmatpush2.bf16.msra.mxu0 0
    %280 = vmatprep.subr.bf16.mxu0 0
    %281 = vmatpush2.bf16.msra.mxu0 0
    %282 = vmatprep.subr.bf16.mxu0 0
    %283 = vmatpush2.bf16.msra.mxu0 0
    %284 = vmatprep.mubr.bf16.mxu0 0
    %285 = vmatmul.mubr.bf16.gmra.mxu0 %v187
    %v286 = vpop.f32.mrf.mxu0
    %v287 = vadd.f32 0.0, %v286
    %v288 = vpop.f32.mrf.mxu0
    %v289 = vpop.f32.mrf.mxu0
    %v290 = vadd.f32 0.0, %v289
    %v291 = vpop.f32.mrf.mxu0
    %292 = vdwg.mxu0
    %v293 = vpack.c.bf16 %v290, %v287
    %v294 = vld [vmem:[%s4] sm:$0xf]
    %v295 = vld [vmem:[%s4 + $0x4] sm:$0xf]
    %v296 = vld [vmem:[%s4 + $0x8] sm:$0xf]
    %v297 = vld [vmem:[%s4 + $0xc] sm:$0xf]
    %v298 = vld [vmem:[%s4 + $0x10] sm:$0xf]
    %v299 = vld [vmem:[%s4 + $0x14] sm:$0xf]
    %v300 = vld [vmem:[%s4 + $0x18] sm:$0xf]
    %v301 = vld [vmem:[%s4 + $0x1c] sm:$0xf]
    %v310 = vunpack.c.l.b16 %v294
    %v311 = vunpack.c.l.b16 %v295
    %v312 = vunpack.c.l.b16 %v296
    %v313 = vunpack.c.l.b16 %v297
    %v314 = vunpack.c.l.b16 %v298
    %v315 = vunpack.c.l.b16 %v299
    %v316 = vunpack.c.l.b16 %v300
    %v317 = vunpack.c.l.b16 %v301
    %v318 = vpack.c.b16 %v311, %v310
    %v319 = vpack.c.b16 %v313, %v312
    %v320 = vpack.c.b16 %v315, %v314
    %v321 = vpack.c.b16 %v317, %v316
    %v327 = vsel %vm77, %v293, 0
    %329 = vmatprep.subr.bf16.mxu0 0
    %330 = vmatpush1.bf16.msra.mxu0 0
    %331 = vmatprep.subr.bf16.mxu0 0
    %332 = vmatpush1.bf16.msra.mxu0 0
    %333 = vmatprep.subr.bf16.mxu0 0
    %334 = vmatpush1.bf16.msra.mxu0 0
    %335 = vmatprep.subr.bf16.mxu0 0
    %336 = vmatpush1.bf16.msra.mxu0 0
    %337 = vmatprep.subr.bf16.mxu0 0
    %338 = vmatpush1.bf16.msra.mxu0 %v321
    %339 = vmatprep.subr.bf16.mxu0 0
    %340 = vmatpush1.bf16.msra.mxu0 %v320
    %341 = vmatprep.subr.bf16.mxu0 0
    %342 = vmatpush1.bf16.msra.mxu0 %v319
    %343 = vmatprep.subr.bf16.mxu0 0
    %344 = vmatpush1.bf16.msra.mxu0 %v318
    %345 = vmatprep.subr.bf16.mxu0 0
    %346 = vmatpush2.bf16.msra.mxu0 0
    %347 = vmatprep.subr.bf16.mxu0 0
    %348 = vmatpush2.bf16.msra.mxu0 0
    %349 = vmatprep.subr.bf16.mxu0 0
    %350 = vmatpush2.bf16.msra.mxu0 0
    %351 = vmatprep.subr.bf16.mxu0 0
    %352 = vmatpush2.bf16.msra.mxu0 0
    %353 = vmatprep.subr.bf16.mxu0 0
    %354 = vmatpush2.bf16.msra.mxu0 0
    %355 = vmatprep.subr.bf16.mxu0 0
    %356 = vmatpush2.bf16.msra.mxu0 0
    %357 = vmatprep.subr.bf16.mxu0 0
    %358 = vmatpush2.bf16.msra.mxu0 0
    %359 = vmatprep.subr.bf16.mxu0 0
    %360 = vmatpush2.bf16.msra.mxu0 0
    %361 = vmatprep.mubr.bf16.mxu0 0
    %362 = vmatmul.mubr.bf16.gmra.mxu0 %v327
    %v363 = vpop.f32.mrf.mxu0
    %v364 = vadd.f32 0.0, %v363
    %v365 = vpop.f32.mrf.mxu0
    %v366 = vpop.f32.mrf.mxu0
    %v367 = vadd.f32 0.0, %v366
    %v368 = vpop.f32.mrf.mxu0
    %369 = vdwg.mxu0
    %v370 = vld [vmem:[%s5] sm:$0x1]
    %v371 = vpack.c.bf16 %v367, %v364
    %vm372 = vcmask 130048
    %v374 = vsel %vm372, %v370, 0
    %376 = vmatprep.subr.bf16.mxu0 0
    %377 = vmatpush1.bf16.msra.mxu0 0
    %378 = vmatprep.subr.bf16.mxu0 0
    %379 = vmatpush1.bf16.msra.mxu0 0
    %380 = vmatprep.subr.bf16.mxu0 0
    %381 = vmatpush1.bf16.msra.mxu0 0
    %382 = vmatprep.subr.bf16.mxu0 0
    %383 = vmatpush1.bf16.msra.mxu0 0
    %384 = vmatprep.subr.bf16.mxu0 0
    %385 = vmatpush1.bf16.msra.mxu0 0
    %386 = vmatprep.subr.bf16.mxu0 0
    %387 = vmatpush1.bf16.msra.mxu0 0
    %388 = vmatprep.subr.bf16.mxu0 0
    %389 = vmatpush1.bf16.msra.mxu0 0
    %390 = vmatprep.subr.bf16.mxu0 0
    %391 = vmatpush1.bf16.msra.mxu0 %v371
    %392 = vmatprep.subr.bf16.mxu0 0
    %393 = vmatpush2.bf16.msra.mxu0 0
    %394 = vmatprep.subr.bf16.mxu0 0
    %395 = vmatpush2.bf16.msra.mxu0 0
    %396 = vmatprep.subr.bf16.mxu0 0
    %397 = vmatpush2.bf16.msra.mxu0 0
    %398 = vmatprep.subr.bf16.mxu0 0
    %399 = vmatpush2.bf16.msra.mxu0 0
    %400 = vmatprep.subr.bf16.mxu0 0
    %401 = vmatpush2.bf16.msra.mxu0 0
    %402 = vmatprep.subr.bf16.mxu0 0
    %403 = vmatpush2.bf16.msra.mxu0 0
    %404 = vmatprep.subr.bf16.mxu0 0
    %405 = vmatpush2.bf16.msra.mxu0 0
    %406 = vmatprep.subr.bf16.mxu0 0
    %407 = vmatpush2.bf16.msra.mxu0 0
    %408 = vmatprep.mubr.bf16.mxu0 0
    %409 = vmatmul.mubr.bf16.gmra.mxu0 %v374
    %v410 = vpop.f32.mrf.mxu0
    %v411 = vadd.f32 0.0, %v410
    %v412 = vpop.f32.mrf.mxu0
    %v413 = vpop.f32.mrf.mxu0
    %v414 = vpop.f32.mrf.mxu0
    %415 = vdwg.mxu0
    %v416 = vpack.c.bf16 %v411, %v411
    %v417 = vld [vmem:[%s6] sm:$0xf]
    %v418 = vld [vmem:[%s6 + $0x4] sm:$0xf]
    %v419 = vld [vmem:[%s6 + $0x8] sm:$0xf]
    %v420 = vld [vmem:[%s6 + $0xc] sm:$0xf]
    %v421 = vld [vmem:[%s6 + $0x10] sm:$0xf]
    %v422 = vld [vmem:[%s6 + $0x14] sm:$0xf]
    %v423 = vld [vmem:[%s6 + $0x18] sm:$0xf]
    %v424 = vld [vmem:[%s6 + $0x1c] sm:$0xf]
    %v425 = vld [vmem:[%s7] sm:$0x1]
    %v427 = vlaneseq
    %v428 = vshrl.u32 %v427, 7
    %v429 = vsub.s32 0, %v428
    %v430 = vrot.slane %v425, %v429
    %v440 = vunpack.c.l.b16 %v417
    %v441 = vunpack.c.l.b16 %v418
    %v442 = vunpack.c.l.b16 %v419
    %v443 = vunpack.c.l.b16 %v420
    %v444 = vunpack.c.l.b16 %v421
    %v445 = vunpack.c.l.b16 %v422
    %v446 = vunpack.c.l.b16 %v423
    %v447 = vunpack.c.l.b16 %v424
    %v448 = vpack.c.b16 %v441, %v440
    %v449 = vpack.c.b16 %v443, %v442
    %v450 = vpack.c.b16 %v445, %v444
    %v451 = vpack.c.b16 %v447, %v446
    %v457 = vsel %vm77, %v416, 0
    %459 = vmatprep.subr.bf16.mxu0 0
    %460 = vmatpush1.bf16.msra.mxu0 0
    %461 = vmatprep.subr.bf16.mxu0 0
    %462 = vmatpush1.bf16.msra.mxu0 0
    %463 = vmatprep.subr.bf16.mxu0 0
    %464 = vmatpush1.bf16.msra.mxu0 0
    %465 = vmatprep.subr.bf16.mxu0 0
    %466 = vmatpush1.bf16.msra.mxu0 0
    %467 = vmatprep.subr.bf16.mxu0 0
    %468 = vmatpush1.bf16.msra.mxu0 %v451
    %469 = vmatprep.subr.bf16.mxu0 0
    %470 = vmatpush1.bf16.msra.mxu0 %v450
    %471 = vmatprep.subr.bf16.mxu0 0
    %472 = vmatpush1.bf16.msra.mxu0 %v449
    %473 = vmatprep.subr.bf16.mxu0 0
    %474 = vmatpush1.bf16.msra.mxu0 %v448
    %475 = vmatprep.subr.bf16.mxu0 0
    %476 = vmatpush2.bf16.msra.mxu0 0
    %477 = vmatprep.subr.bf16.mxu0 0
    %478 = vmatpush2.bf16.msra.mxu0 0
    %479 = vmatprep.subr.bf16.mxu0 0
    %480 = vmatpush2.bf16.msra.mxu0 0
    %481 = vmatprep.subr.bf16.mxu0 0
    %482 = vmatpush2.bf16.msra.mxu0 0
    %483 = vmatprep.subr.bf16.mxu0 0
    %484 = vmatpush2.bf16.msra.mxu0 0
    %485 = vmatprep.subr.bf16.mxu0 0
    %486 = vmatpush2.bf16.msra.mxu0 0
    %487 = vmatprep.subr.bf16.mxu0 0
    %488 = vmatpush2.bf16.msra.mxu0 0
    %489 = vmatprep.subr.bf16.mxu0 0
    %490 = vmatpush2.bf16.msra.mxu0 0
    %491 = vmatprep.mubr.bf16.mxu0 0
    %492 = vmatmul.mubr.bf16.gmra.mxu0 %v457
    %v493 = vpop.f32.mrf.mxu0
    %v494 = vadd.f32 %v430, %v493
    %v495 = vpop.f32.mrf.mxu0
    %v496 = vpop.f32.mrf.mxu0
    %v497 = vpop.f32.mrf.mxu0
    %498 = vdwg.mxu0
    %499 = vst [vmem:[#allocation2] sm:$0x3] %v494
    // Predicated region
    $region34: #{eval_surrogate_forward.1} parent=1 // pred_check
      _
    $region35: #{eval_surrogate_forward.1} parent=1 // pred_check_branch
      %501 = sbr.rel (0) target = $region37
    $region36: #{eval_surrogate_forward.1} parent=1 // pred_region
      %s503 = ssub.s32 32, 32
      %504 = vsyncadd [#allocation3], %s503
      %s506 = sshll.u32 [#allocation2], 4
      %s507 = int_to_ptr.vmem [resolvable:$true] %s506
      %509 = dma.vmem_to_hbm [thread:$0]  %s507, 32, %s8, [#allocation3]
    $region37: #{eval_surrogate_forward.1} parent=1 // pred_fallthru
      _
    // Predicated region
    $region38: #{eval_surrogate_forward.1} parent=1 // pred_check
      _
    $region39: #{eval_surrogate_forward.1} parent=1 // pred_check_branch
      %511 = sbr.rel (0) target = $region41
    $region40: #{eval_surrogate_forward.1} parent=1 // pred_region
      %512 = dma.done [#allocation3], 32
    $region41: #{eval_surrogate_forward.1} parent=1 // pred_fallthru
      _
    %513 = vsyncpa [#allocation3], 1

</llo_original>
